<compile_context>
chip_gen: v7x
topology: tpu7x:2x2x1
jax: 0.10.0
libtpu: 0.0.40
codegen_flags: <defaults>
</compile_context>

<pallas_src>
import jax
import jax.numpy as jnp
from jax.experimental import pallas as pl
from jax.experimental.pallas import tpu as pltpu

IN_FEATURES = 500
OUT_FEATURES = 10
N_PAD = 128                 # lane-dense padded output width
TILE_B_DEFAULT = 2048       # batch tile (sized for v7x 64 MiB VMEM)


def lenet_classifier_kernel(feat_ref, w_ref, b_ref, out_ref):
    """ReLU -> (dropout = identity, eval) -> Linear on one (TILE_B, 500) tile."""
    # Upcast (no-op for f32 inputs; enables bf16-fed activations on all chips).
    x = jnp.maximum(feat_ref[...].astype(jnp.float32), jnp.float32(0.0))  # F.relu
    # F.dropout(training=False) == identity.
    y = jnp.dot(x, w_ref[...], preferred_element_type=jnp.float32)        # MXU
    out_ref[...] = (y + b_ref[...]).astype(out_ref.dtype)                 # + bias


def lenet_classifier_forward(feat, w_pad, b_pad, *, tile_b=TILE_B_DEFAULT):
    """feat: (B, 500), w_pad: (500, 128) f32, b_pad: (1, 128) f32 -> (B, 10) f32."""
    batch = feat.shape[0]
    # Single full-batch block for small batches; otherwise fixed tiles
    # (partial last block handled by Pallas).
    tb = batch if batch <= tile_b else tile_b
    grid = (pl.cdiv(batch, tb),)

    itemsize = jnp.dtype(feat.dtype).itemsize
    cost = pl.CostEstimate(
        flops=2 * batch * IN_FEATURES * OUT_FEATURES,
        transcendentals=0,
        bytes_accessed=(batch * IN_FEATURES * itemsize
                        + IN_FEATURES * N_PAD * 4
                        + batch * N_PAD * 4),
    )

    out_padded = pl.pallas_call(
        lenet_classifier_kernel,
        out_shape=jax.ShapeDtypeStruct((batch, N_PAD), jnp.float32),
        grid_spec=pltpu.PrefetchScalarGridSpec(
            num_scalar_prefetch=0,
            grid=grid,
            in_specs=[
                # Streamed batch tiles of the activations.
                pl.BlockSpec((tb, IN_FEATURES), lambda i: (i, 0)),
                # Small weight / bias: fully resident, same block every step.
                pl.BlockSpec((IN_FEATURES, N_PAD), lambda i: (0, 0)),
                pl.BlockSpec((1, N_PAD), lambda i: (0, 0)),
            ],
            out_specs=pl.BlockSpec((tb, N_PAD), lambda i: (i, 0)),
        ),
        compiler_params=pltpu.CompilerParams(
            dimension_semantics=("parallel",),   # shard batch across v7x TCs
        ),
        cost_estimate=cost,
    )(feat, w_pad, b_pad)

    # Drop the lane padding outside the kernel (cheap XLA slice).
    return out_padded[:, :OUT_FEATURES]


def init_params(key):
    """Deterministic init mimicking nn.Linear(500, 10) default (U[-k, k], k=1/sqrt(500))."""
    kw, kb = jax.random.split(key)
    bound = 1.0 / (IN_FEATURES ** 0.5)
    # PyTorch stores weight as (out, in); keep that convention here.
    w = jax.random.uniform(kw, (OUT_FEATURES, IN_FEATURES), jnp.float32, -bound, bound)
    b = jax.random.uniform(kb, (OUT_FEATURES,), jnp.float32, -bound, bound)
    return w, b


def prepare_params(w, b):
    """One-time param prep: transpose to (in, out) and zero-pad N 10 -> 128."""
    w_t = jnp.transpose(w).astype(jnp.float32)                      # (500, 10)
    w_pad = jnp.zeros((IN_FEATURES, N_PAD), jnp.float32)
    w_pad = w_pad.at[:, :OUT_FEATURES].set(w_t)                     # (500, 128)
    b_pad = jnp.zeros((1, N_PAD), jnp.float32)
    b_pad = b_pad.at[0, :OUT_FEATURES].set(b.astype(jnp.float32))   # (1, 128)
    return w_pad, b_pad


if __name__ == "__main__":
    key = jax.random.PRNGKey(0)
    k_feat, k_params = jax.random.split(key)

    batch = 2
    feat = jax.random.normal(k_feat, (batch, IN_FEATURES), jnp.float32)
    w, b = init_params(k_params)

    # Hoisted one-time parameter preparation (transpose + pad).
    w_pad, b_pad = prepare_params(w, b)

    fwd = jax.jit(lenet_classifier_forward)
    out = fwd(feat, w_pad, b_pad)
    out = jax.block_until_ready(out)

    # Sanity check against plain-JAX reference of the same math (eval dropout = identity).
    ref = jnp.maximum(feat, 0.0) @ jnp.transpose(w) + b.reshape(1, OUT_FEATURES)
    assert out.shape == (batch, OUT_FEATURES)
    assert jnp.allclose(out, ref, atol=1e-5, rtol=1e-5)

    print("KERNEL_OK")
</pallas_src>

<mosaic_0001>
module attributes {stable_mosaic.version = 11 : i64} {
  func.func @lenet_classifier_kernel(%arg0: i32, %arg1: memref<2x500xf32, #tpu.memory_space<vmem>>, %arg2: memref<500x128xf32, #tpu.memory_space<vmem>>, %arg3: memref<1x128xf32, #tpu.memory_space<vmem>>, %arg4: memref<2x128xf32, #tpu.memory_space<vmem>>) attributes {dimension_semantics = [#tpu.dimension_semantics<parallel>], iteration_bounds = array<i64: 1>, scalar_prefetch = 0 : i64, scratch_operands = 0 : i64, tpu.core_type = #tpu.core_type<tc>, window_params = [{transform_indices = @transform_0, window_bounds = array<i64: 2, 500>}, {pipeline_mode = #tpu.pipeline_mode<synchronous>, transform_indices = @transform_1, window_bounds = array<i64: 500, 128>}, {pipeline_mode = #tpu.pipeline_mode<synchronous>, transform_indices = @transform_2, window_bounds = array<i64: 1, 128>}, {transform_indices = @transform_3, window_bounds = array<i64: 2, 128>}]} {
    %c0 = arith.constant 0 : index
    %c0_0 = arith.constant 0 : index
    %0 = vector.load %arg1[%c0, %c0_0] : memref<2x500xf32, #tpu.memory_space<vmem>>, vector<2x500xf32>
    %cst = arith.constant 0.000000e+00 : f32
    %1 = vector.broadcast %cst : f32 to vector<2x500xf32>
    %2 = arith.maximumf %0, %1 : vector<2x500xf32>
    %c0_1 = arith.constant 0 : index
    %c0_2 = arith.constant 0 : index
    %3 = vector.load %arg2[%c0_1, %c0_2] : memref<500x128xf32, #tpu.memory_space<vmem>>, vector<500x128xf32>
    %cst_3 = arith.constant dense<0.000000e+00> : vector<2x128xf32>
    %4 = tpu.matmul %2, %3, %cst_3 {dimension_numbers = #tpu.dot_dimension_numbers<[1], [0], [0], [1], [0, 0, 1, 1], [], []>} : vector<2x500xf32>, vector<500x128xf32>, vector<2x128xf32> -> vector<2x128xf32>
    %c0_4 = arith.constant 0 : index
    %c0_5 = arith.constant 0 : index
    %5 = vector.load %arg3[%c0_4, %c0_5] : memref<1x128xf32, #tpu.memory_space<vmem>>, vector<1x128xf32>
    %6 = vector.broadcast %5 : vector<1x128xf32> to vector<2x128xf32>
    %7 = arith.addf %4, %6 : vector<2x128xf32>
    %c0_6 = arith.constant 0 : index
    %c0_7 = arith.constant 0 : index
    %8 = vector.load %arg4[%c0_6, %c0_7] : memref<2x128xf32, #tpu.memory_space<vmem>>, vector<2x128xf32>
    tpu.vector_store %arg4[%c0_6, %c0_7], %7 {strides = array<i32>} : memref<2x128xf32, #tpu.memory_space<vmem>>, vector<2x128xf32>,
    return
  }
  func.func @transform_0(%arg0: i32) -> (i32, i32) {
    %c0_i32 = arith.constant 0 : i32
    %c0_i32_0 = arith.constant 0 : i32
    return %arg0, %c0_i32 : i32, i32
  }
  func.func @transform_1(%arg0: i32) -> (i32, i32) {
    %c0_i32 = arith.constant 0 : i32
    %c0_i32_0 = arith.constant 0 : i32
    %c0_i32_1 = arith.constant 0 : i32
    return %c0_i32, %c0_i32_0 : i32, i32
  }
  func.func @transform_2(%arg0: i32) -> (i32, i32) {
    %c0_i32 = arith.constant 0 : i32
    %c0_i32_0 = arith.constant 0 : i32
    %c0_i32_1 = arith.constant 0 : i32
    return %c0_i32, %c0_i32_0 : i32, i32
  }
  func.func @transform_3(%arg0: i32) -> (i32, i32) {
    %c0_i32 = arith.constant 0 : i32
    %c0_i32_0 = arith.constant 0 : i32
    return %arg0, %c0_i32 : i32, i32
  }
}

</mosaic_0001>

<llo_original>
// kernel: lenet_classifier_forward.1
$region0: #{lenet_classifier_forward.1}
  #allocation0 [shape = 'u32[]', space=smem, size = 0x4, offset = 0x4, fixed_abs, tag = 'smem constant byte address 0x4 - core index']
  #allocation1 [shape = 'u32[144,128]{1,0:T(1,128)}', space=vmem, size = 0x12000, scoped, tag = 'internal scratch']
  %s0 = inlined_call_operand.hbm [shape: f32[2,500], index: 0, kind: input, shape index: {}]
  %s1 = inlined_call_operand.hbm [shape: f32[500,128], index: 1, kind: input, shape index: {}]
  %s2 = inlined_call_operand.vmem [shape: f32[1,128], index: 2, kind: input, shape index: {}]
  %s3 = inlined_call_operand.hbm [shape: f32[2,128], index: 3, kind: output, shape index: {}]
  %s4 = sld [smem:[#allocation0]]
  $region30: #{lenet_classifier_forward.1} parent=0
    _
  %s6 = ssub.s32 1, %s4
  %s7 = scalar_select 0, %s6, %s4
  $region1: #{lenet_classifier_forward.1} parent=0
    #allocation2 [shape = 'u8[4096]{0}', space=vmem, size = 0x1000, scoped, tag = 'input window, operand 0, single buffered']
    #allocation3 [shape = 's32[1]{0}', space=sflag, size = 0x4, scoped, tag = 'scoped memory for lenet_classifier_forward.1']
    #allocation4 [shape = 's32[1]{0}', space=sflag, size = 0x4, scoped, tag = 'scoped memory for lenet_classifier_forward.1']
    #allocation5 [shape = 'u8[258048]{0}', space=vmem, size = 0x3f000, scoped, tag = 'input window, operand 1, single buffered']
    #allocation6 [shape = 's32[1]{0}', space=sflag, size = 0x4, scoped, tag = 'scoped memory for lenet_classifier_forward.1']
    #allocation7 [shape = 'u8[1024]{0}', space=vmem, size = 0x400, scoped, tag = 'output window, operand 0, single buffered']
    %8 = vsyncpa [#allocation3], 0
    %9 = vsyncpa [#allocation6], 0
    %10 = vsyncpa [#allocation4], 0
    // Predicated region
    $region2: #{lenet_classifier_forward.1} parent=1 // pred_check
      _
    $region3: #{lenet_classifier_forward.1} parent=1 // pred_check_branch
      %12 = sbr.rel (0) target = $region5
    $region4: #{lenet_classifier_forward.1} parent=1 // pred_region
      %s14 = ssub.s32 128, 128
      %15 = vsyncadd [#allocation3], %s14
      %s17 = sshll.u32 [#allocation2], 4
      %s18 = int_to_ptr.vmem [resolvable:$true] %s17
      %20 = dma.hbm_to_vmem [thread:$0]  %s0, 128, %s18, [#allocation3]
    $region5: #{lenet_classifier_forward.1} parent=1 // pred_fallthru
      _
    // Predicated region
    $region6: #{lenet_classifier_forward.1} parent=1 // pred_check
      _
    $region7: #{lenet_classifier_forward.1} parent=1 // pred_check_branch
      %22 = sbr.rel (0) target = $region9
    $region8: #{lenet_classifier_forward.1} parent=1 // pred_region
      %s24 = ssub.s32 8064, 8064
      %25 = vsyncadd [#allocation6], %s24
      %s26 = sshll.u32 [#allocation5], 4
      %s27 = int_to_ptr.vmem [resolvable:$true] %s26
      %32 = dma.hbm_to_vmem [thread:$0]  %s1, 8064, %s27, [#allocation6], 128, 128, 8
    $region9: #{lenet_classifier_forward.1} parent=1 // pred_fallthru
      _
    // Predicated region
    $region10: #{lenet_classifier_forward.1} parent=1 // pred_check
      _
    $region11: #{lenet_classifier_forward.1} parent=1 // pred_check_branch
      %34 = sbr.rel (0) target = $region13
    $region12: #{lenet_classifier_forward.1} parent=1 // pred_region
      _
    $region13: #{lenet_classifier_forward.1} parent=1 // pred_fallthru
      _
    // Predicated region
    $region14: #{lenet_classifier_forward.1} parent=1 // pred_check
      _
    $region15: #{lenet_classifier_forward.1} parent=1 // pred_check_branch
      %36 = sbr.rel (0) target = $region17
    $region16: #{lenet_classifier_forward.1} parent=1 // pred_region
      %37 = dma.done [#allocation3], 128
    $region17: #{lenet_classifier_forward.1} parent=1 // pred_fallthru
      _
    // Predicated region
    $region18: #{lenet_classifier_forward.1} parent=1 // pred_check
      _
    $region19: #{lenet_classifier_forward.1} parent=1 // pred_check_branch
      %39 = sbr.rel (0) target = $region21
    $region20: #{lenet_classifier_forward.1} parent=1 // pred_region
      %40 = dma.done [#allocation6], 8064
    $region21: #{lenet_classifier_forward.1} parent=1 // pred_fallthru
      _
    %v41 = vld [vmem:[#allocation2] sm:$0xff]
    %v42 = vmax.f32 %v41, 0.0
    %v43 = vld [vmem:[#allocation5] sm:$0xff]
    %v44 = vld [vmem:[#allocation5 + $0x8] sm:$0xff]
    %v45 = vld [vmem:[#allocation5 + $0x10] sm:$0xff]
    %v46 = vld [vmem:[#allocation5 + $0x18] sm:$0xff]
    %v47 = vld [vmem:[#allocation5 + $0x20] sm:$0xff]
    %v48 = vld [vmem:[#allocation5 + $0x28] sm:$0xff]
    %v49 = vld [vmem:[#allocation5 + $0x30] sm:$0xff]
    %v50 = vld [vmem:[#allocation5 + $0x38] sm:$0xff]
    %v51 = vld [vmem:[#allocation5 + $0x40] sm:$0xff]
    %v52 = vld [vmem:[#allocation5 + $0x48] sm:$0xff]
    %v53 = vld [vmem:[#allocation5 + $0x50] sm:$0xff]
    %v54 = vld [vmem:[#allocation5 + $0x58] sm:$0xff]
    %v55 = vld [vmem:[#allocation5 + $0x60] sm:$0xff]
    %v56 = vld [vmem:[#allocation5 + $0x68] sm:$0xff]
    %v57 = vld [vmem:[#allocation5 + $0x70] sm:$0xff]
    %v58 = vld [vmem:[#allocation5 + $0x78] sm:$0xff]
    %v59 = vld [vmem:[#allocation5 + $0x80] sm:$0xff]
    %v60 = vld [vmem:[#allocation5 + $0x88] sm:$0xff]
    %v61 = vld [vmem:[#allocation5 + $0x90] sm:$0xff]
    %v62 = vld [vmem:[#allocation5 + $0x98] sm:$0xff]
    %v63 = vld [vmem:[#allocation5 + $0xa0] sm:$0xff]
    %v64 = vld [vmem:[#allocation5 + $0xa8] sm:$0xff]
    %v65 = vld [vmem:[#allocation5 + $0xb0] sm:$0xff]
    %v66 = vld [vmem:[#allocation5 + $0xb8] sm:$0xff]
    %v67 = vld [vmem:[#allocation5 + $0xc0] sm:$0xff]
    %v68 = vld [vmem:[#allocation5 + $0xc8] sm:$0xff]
    %v69 = vld [vmem:[#allocation5 + $0xd0] sm:$0xff]
    %v70 = vld [vmem:[#allocation5 + $0xd8] sm:$0xff]
    %v71 = vld [vmem:[#allocation5 + $0xe0] sm:$0xff]
    %v72 = vld [vmem:[#allocation5 + $0xe8] sm:$0xff]
    %v73 = vld [vmem:[#allocation5 + $0xf0] sm:$0xff]
    %v74 = vld [vmem:[#allocation5 + $0xf8] sm:$0xff]
    %v75 = vld [vmem:[#allocation5 + $0x100] sm:$0xff]
    %v76 = vld [vmem:[#allocation5 + $0x108] sm:$0xff]
    %v77 = vld [vmem:[#allocation5 + $0x110] sm:$0xff]
    %v78 = vld [vmem:[#allocation5 + $0x118] sm:$0xff]
    %v79 = vld [vmem:[#allocation5 + $0x120] sm:$0xff]
    %v80 = vld [vmem:[#allocation5 + $0x128] sm:$0xff]
    %v81 = vld [vmem:[#allocation5 + $0x130] sm:$0xff]
    %v82 = vld [vmem:[#allocation5 + $0x138] sm:$0xff]
    %v83 = vld [vmem:[#allocation5 + $0x140] sm:$0xff]
    %v84 = vld [vmem:[#allocation5 + $0x148] sm:$0xff]
    %v85 = vld [vmem:[#allocation5 + $0x150] sm:$0xff]
    %v86 = vld [vmem:[#allocation5 + $0x158] sm:$0xff]
    %v87 = vld [vmem:[#allocation5 + $0x160] sm:$0xff]
    %v88 = vld [vmem:[#allocation5 + $0x168] sm:$0xff]
    %v89 = vld [vmem:[#allocation5 + $0x170] sm:$0xff]
    %v90 = vld [vmem:[#allocation5 + $0x178] sm:$0xff]
    %v91 = vld [vmem:[#allocation5 + $0x180] sm:$0xff]
    %v92 = vld [vmem:[#allocation5 + $0x188] sm:$0xff]
    %v93 = vld [vmem:[#allocation5 + $0x190] sm:$0xff]
    %v94 = vld [vmem:[#allocation5 + $0x198] sm:$0xff]
    %v95 = vld [vmem:[#allocation5 + $0x1a0] sm:$0xff]
    %v96 = vld [vmem:[#allocation5 + $0x1a8] sm:$0xff]
    %v97 = vld [vmem:[#allocation5 + $0x1b0] sm:$0xff]
    %v98 = vld [vmem:[#allocation5 + $0x1b8] sm:$0xff]
    %v99 = vld [vmem:[#allocation5 + $0x1c0] sm:$0xff]
    %v100 = vld [vmem:[#allocation5 + $0x1c8] sm:$0xff]
    %v101 = vld [vmem:[#allocation5 + $0x1d0] sm:$0xff]
    %v102 = vld [vmem:[#allocation5 + $0x1d8] sm:$0xff]
    %v103 = vld [vmem:[#allocation5 + $0x1e0] sm:$0xff]
    %v104 = vld [vmem:[#allocation5 + $0x1e8] sm:$0xff]
    %v105 = vld [vmem:[#allocation5 + $0x1f0] sm:$0xf]
    %v106 = vld [vmem:[%s2] sm:$0x1]
    %v108 = vlaneseq
    %v109 = vshrl.u32 %v108, 7
    %v110 = vsub.s32 0, %v109
    %v111 = vrot.slane %v106, %v110
    %v114 = vcombine.high %v42, %v42
    %v116 = vunpack.c.l.s4 1983009808
    %v117 = vunpack.c.0.s8 %v116
    %v118 = vlaneseq
    %v119 = vshrl.u32 %v118, 7
    %v120 = vsub.s32 %v117, %v119
    %v121 = vrot.slane %v42, %v120
    %v123 = vunpack.c.l.s4 1983009808
    %v124 = vunpack.c.0.s8 %v123
    %v125 = vlaneseq
    %v126 = vshrl.u32 %v125, 7
    %v127 = vsub.s32 %v124, %v126
    %v128 = vrot.slane %v114, %v127
    %v129 = vcombine.high %v121, %v121
    %v130 = vcombine.high %v128, %v128
    %vm134 = vcmask 949248
    %v135 = vsel %vm134, %v130, 0
    %vm137 = vcmask 1043456
    %v139 = vsel %vm137, %v105, 0
    %141 = vmatprep.subr.mxu0 0.0
    %142 = vmatpush1.msra.mxu0 %v43
    %143 = vmatprep.subr.mxu0 0.0
    %144 = vmatpush1.msra.mxu0 %v44
    %145 = vmatprep.subr.mxu0 0.0
    %146 = vmatpush1.msra.mxu0 %v45
    %147 = vmatprep.subr.mxu0 0.0
    %148 = vmatpush1.msra.mxu0 %v46
    %149 = vmatprep.subr.mxu0 0.0
    %150 = vmatpush1.msra.mxu0 %v47
    %151 = vmatprep.subr.mxu0 0.0
    %152 = vmatpush1.msra.mxu0 %v48
    %153 = vmatprep.subr.mxu0 0.0
    %154 = vmatpush1.msra.mxu0 %v49
    %155 = vmatprep.subr.mxu0 0.0
    %156 = vmatpush1.msra.mxu0 %v50
    %157 = vmatprep.subr.mxu0 0.0
    %158 = vmatpush1.msra.mxu0 %v51
    %159 = vmatprep.subr.mxu0 0.0
    %160 = vmatpush1.msra.mxu0 %v52
    %161 = vmatprep.subr.mxu0 0.0
    %162 = vmatpush1.msra.mxu0 %v53
    %163 = vmatprep.subr.mxu0 0.0
    %164 = vmatpush1.msra.mxu0 %v54
    %165 = vmatprep.subr.mxu0 0.0
    %166 = vmatpush1.msra.mxu0 %v55
    %167 = vmatprep.subr.mxu0 0.0
    %168 = vmatpush1.msra.mxu0 %v56
    %169 = vmatprep.subr.mxu0 0.0
    %170 = vmatpush1.msra.mxu0 %v57
    %171 = vmatprep.subr.mxu0 0.0
    %172 = vmatpush1.msra.mxu0 %v58
    %173 = vmatprep.subr.mxu0 0.0
    %174 = vmatpush1.msra.mxu0 %v59
    %175 = vmatprep.subr.mxu0 0.0
    %176 = vmatpush1.msra.mxu0 %v60
    %177 = vmatprep.subr.mxu0 0.0
    %178 = vmatpush1.msra.mxu0 %v61
    %179 = vmatprep.subr.mxu0 0.0
    %180 = vmatpush1.msra.mxu0 %v62
    %181 = vmatprep.subr.mxu0 0.0
    %182 = vmatpush1.msra.mxu0 %v63
    %183 = vmatprep.subr.mxu0 0.0
    %184 = vmatpush1.msra.mxu0 %v64
    %185 = vmatprep.subr.mxu0 0.0
    %186 = vmatpush1.msra.mxu0 %v65
    %187 = vmatprep.subr.mxu0 0.0
    %188 = vmatpush1.msra.mxu0 %v66
    %189 = vmatprep.subr.mxu0 0.0
    %190 = vmatpush1.msra.mxu0 %v67
    %191 = vmatprep.subr.mxu0 0.0
    %192 = vmatpush1.msra.mxu0 %v68
    %193 = vmatprep.subr.mxu0 0.0
    %194 = vmatpush1.msra.mxu0 %v69
    %195 = vmatprep.subr.mxu0 0.0
    %196 = vmatpush1.msra.mxu0 %v70
    %197 = vmatprep.subr.mxu0 0.0
    %198 = vmatpush1.msra.mxu0 %v71
    %199 = vmatprep.subr.mxu0 0.0
    %200 = vmatpush1.msra.mxu0 %v72
    %201 = vmatprep.subr.mxu0 0.0
    %202 = vmatpush1.msra.mxu0 %v73
    %203 = vmatprep.subr.mxu0 0.0
    %204 = vmatpush1.msra.mxu0 %v74
    %205 = vmatprep.mubr.f32.mxu0 %v129
    %206 = vmatmul.mubr.f32.gmra.mrb[0].mxu0 %v121
    %v207 = vpop.f32.mrb[0].mxu0
    %v208 = vadd.f32 %v111, %v207
    %v209 = vpop.f32.mrb[0].mxu0
    %210 = vdwg.mxu0
    %211 = vmatprep.subr.mxu0 0.0
    %212 = vmatpush1.msra.mxu0 %v75
    %213 = vmatprep.subr.mxu0 0.0
    %214 = vmatpush1.msra.mxu0 %v76
    %215 = vmatprep.subr.mxu0 0.0
    %216 = vmatpush1.msra.mxu0 %v77
    %217 = vmatprep.subr.mxu0 0.0
    %218 = vmatpush1.msra.mxu0 %v78
    %219 = vmatprep.subr.mxu0 0.0
    %220 = vmatpush1.msra.mxu0 %v79
    %221 = vmatprep.subr.mxu0 0.0
    %222 = vmatpush1.msra.mxu0 %v80
    %223 = vmatprep.subr.mxu0 0.0
    %224 = vmatpush1.msra.mxu0 %v81
    %225 = vmatprep.subr.mxu0 0.0
    %226 = vmatpush1.msra.mxu0 %v82
    %227 = vmatprep.subr.mxu0 0.0
    %228 = vmatpush1.msra.mxu0 %v83
    %229 = vmatprep.subr.mxu0 0.0
    %230 = vmatpush1.msra.mxu0 %v84
    %231 = vmatprep.subr.mxu0 0.0
    %232 = vmatpush1.msra.mxu0 %v85
    %233 = vmatprep.subr.mxu0 0.0
    %234 = vmatpush1.msra.mxu0 %v86
    %235 = vmatprep.subr.mxu0 0.0
    %236 = vmatpush1.msra.mxu0 %v87
    %237 = vmatprep.subr.mxu0 0.0
    %238 = vmatpush1.msra.mxu0 %v88
    %239 = vmatprep.subr.mxu0 0.0
    %240 = vmatpush1.msra.mxu0 %v89
    %241 = vmatprep.subr.mxu0 0.0
    %242 = vmatpush1.msra.mxu0 %v90
    %243 = vmatprep.subr.mxu0 0.0
    %244 = vmatpush1.msra.mxu0 %v91
    %245 = vmatprep.subr.mxu0 0.0
    %246 = vmatpush1.msra.mxu0 %v92
    %247 = vmatprep.subr.mxu0 0.0
    %248 = vmatpush1.msra.mxu0 %v93
    %249 = vmatprep.subr.mxu0 0.0
    %250 = vmatpush1.msra.mxu0 %v94
    %251 = vmatprep.subr.mxu0 0.0
    %252 = vmatpush1.msra.mxu0 %v95
    %253 = vmatprep.subr.mxu0 0.0
    %254 = vmatpush1.msra.mxu0 %v96
    %255 = vmatprep.subr.mxu0 0.0
    %256 = vmatpush1.msra.mxu0 %v97
    %257 = vmatprep.subr.mxu0 0.0
    %258 = vmatpush1.msra.mxu0 %v98
    %259 = vmatprep.subr.mxu0 0.0
    %260 = vmatpush1.msra.mxu0 %v99
    %261 = vmatprep.subr.mxu0 0.0
    %262 = vmatpush1.msra.mxu0 %v100
    %263 = vmatprep.subr.mxu0 0.0
    %264 = vmatpush1.msra.mxu0 %v101
    %265 = vmatprep.subr.mxu0 0.0
    %266 = vmatpush1.msra.mxu0 %v102
    %267 = vmatprep.subr.mxu0 0.0
    %268 = vmatpush1.msra.mxu0 %v103
    %269 = vmatprep.subr.mxu0 0.0
    %270 = vmatpush1.msra.mxu0 %v104
    %271 = vmatprep.subr.mxu0 0.0
    %272 = vmatpush1.msra.mxu0 %v139
    %273 = vmatprep.subr.mxu0 0.0
    %274 = vmatpush1.msra.mxu0 0.0
    %275 = vmatprep.mubr.f32.mxu0 %v135
    %276 = vmatmul.mubr.f32.gmra.mrb[0].mxu0 %v128
    %v277 = vpop.f32.mrb[0].mxu0
    %v278 = vadd.f32 %v208, %v277
    %v279 = vpop.f32.mrb[0].mxu0
    %280 = vdwg.mxu0
    %281 = vst [vmem:[#allocation7] sm:$0x3] %v278
    // Predicated region
    $region22: #{lenet_classifier_forward.1} parent=1 // pred_check
      _
    $region23: #{lenet_classifier_forward.1} parent=1 // pred_check_branch
      %283 = sbr.rel (0) target = $region25
    $region24: #{lenet_classifier_forward.1} parent=1 // pred_region
      %s285 = ssub.s32 32, 32
      %286 = vsyncadd [#allocation4], %s285
      %s288 = sshll.u32 [#allocation7], 4
      %s289 = int_to_ptr.vmem [resolvable:$true] %s288
      %291 = dma.vmem_to_hbm [thread:$0]  %s289, 32, %s3, [#allocation4]
    $region25: #{lenet_classifier_forward.1} parent=1 // pred_fallthru
      _
    // Predicated region
    $region26: #{lenet_classifier_forward.1} parent=1 // pred_check
      _
    $region27: #{lenet_classifier_forward.1} parent=1 // pred_check_branch
      %293 = sbr.rel (0) target = $region29
    $region28: #{lenet_classifier_forward.1} parent=1 // pred_region
      %294 = dma.done [#allocation4], 32
    $region29: #{lenet_classifier_forward.1} parent=1 // pred_fallthru
      _
    %295 = vsyncpa [#allocation3], 1
    %296 = vsyncpa [#allocation6], 1
    %297 = vsyncpa [#allocation4], 1

</llo_original>
